<compile_context>
chip_gen: v7x
topology: tpu7x:2x2x1
jax: 0.10.0
libtpu: 0.0.40
codegen_flags: <defaults>
</compile_context>

<pallas_src>
import functools

import numpy as np
import jax
import jax.numpy as jnp
from jax import lax
from jax.experimental import pallas as pl
from jax.experimental.pallas import tpu as pltpu


def _round_up(x: int, m: int) -> int:
    return (x + m - 1) // m * m


def _cdiv(a: int, b: int) -> int:
    return (a + b - 1) // b


def _ce_loss_kernel(tgt_ref, x_ref, loss_ref, m_sc, s_sc, t_sc, *,
                    n_rows, n_classes, block_rows, block_cols, num_col_blocks):
    """One (row-block, class-chunk) step of streaming cross entropy.

    tgt_ref : (TB, 1)  int32   target class index per row (garbage for OOB rows)
    x_ref   : (TB, TC) native  logits chunk (upcast to f32 in-register)
    loss_ref: (TB, 1)  float32 per-row loss, written on the last class chunk
    m/s/t_sc: (TB, 1)  float32 running max / running sum / target logit
    """
    i = pl.program_id(0)          # row block       ("parallel")
    j = pl.program_id(1)          # class chunk     ("arbitrary", streamed)

    @pl.when(j == 0)
    def _():
        m_sc[...] = jnp.full_like(m_sc, -jnp.inf)
        s_sc[...] = jnp.zeros_like(s_sc)
        t_sc[...] = jnp.zeros_like(t_sc)

    # Upcast in vregs; the DMA stays in the native (possibly bf16) dtype.
    x = x_ref[...].astype(jnp.float32)                      # (TB, TC)
    tgt = tgt_ref[...]                                      # (TB, 1) int32
    tb, tc = x.shape

    col_ids = j * block_cols + lax.broadcasted_iota(jnp.int32, (tb, tc), 1)
    if num_col_blocks * block_cols != n_classes:
        # Only needed for the ragged last chunk; compiled out otherwise.
        # Keep the sentinel finite (f32) so no (-inf) - (-inf) NaNs appear.
        x = jnp.where(col_ids < n_classes, x, jnp.float32(-1e30))

    # Target-logit contribution from this chunk (one-hot gather, no scalar loop).
    t_new = t_sc[...] + jnp.sum(jnp.where(col_ids == tgt, x, 0.0),
                                axis=1, keepdims=True)

    # Online (streaming) logsumexp across class chunks.
    m_prev = m_sc[...]
    m_new = jnp.maximum(m_prev, jnp.max(x, axis=1, keepdims=True))
    alpha = jnp.exp(m_prev - m_new)                         # 0 at j == 0
    s_new = alpha * s_sc[...] + jnp.sum(jnp.exp(x - m_new), axis=1, keepdims=True)

    m_sc[...] = m_new
    s_sc[...] = s_new
    t_sc[...] = t_new

    @pl.when(j == pl.num_programs(1) - 1)
    def _():
        lse = m_new + jnp.log(s_new)                        # (TB, 1)
        # Rows beyond the true batch are OOB reads (garbage); the elementwise
        # select zeroes them without letting NaN/Inf leak through.
        row_ids = i * block_rows + lax.broadcasted_iota(jnp.int32, (tb, 1), 0)
        loss_ref[...] = jnp.where(row_ids < n_rows, lse - t_new, 0.0)


def cross_entropy_loss(logits, targets, *, target_block_bytes=4 * 1024 * 1024,
                       block_rows=None, block_cols=None):
    """Equivalent of nn.CrossEntropyLoss()(logits, targets) for 2-D logits.

    logits : (N, C) float (kept in its native dtype), targets : (N,) int.
    """
    N, C = logits.shape
    itemsize = jnp.dtype(logits.dtype).itemsize
    sub = max(8, 32 // itemsize)          # sublane packing: 8 f32, 16 bf16, 32 int8

    # ---- class-chunk size (lane axis): full C when affordable, else 128-aligned.
    if block_cols is not None:
        tc = _round_up(int(block_cols), 128)
        if tc >= C:
            tc = C
    elif C * itemsize * 256 <= target_block_bytes:
        tc = C                            # one full-width chunk, mask compiles out
    else:
        tc = max(128, (target_block_bytes // (256 * itemsize)) // 128 * 128)
        if tc >= C:
            tc = C
    num_col_blocks = _cdiv(C, tc)

    # ---- row-block size (sublane axis): fill ~target_block_bytes of logits.
    if block_rows is not None:
        tb = _round_up(int(block_rows), sub)
    else:
        tb = max(sub, min(8192, target_block_bytes // max(1, tc * itemsize)))
        tb = max(sub, tb // sub * sub)
        tb = min(tb, _round_up(N, sub))
        if _cdiv(N, tb) == 1 and N > 2 * sub:
            # Keep at least 2 row-grid steps so both v7x TensorCores get work.
            tb = _round_up(_cdiv(N, 2), sub)
    tb = min(tb, _round_up(N, sub))
    num_row_blocks = _cdiv(N, tb)

    t = targets.astype(jnp.int32).reshape(N, 1)

    kernel = functools.partial(
        _ce_loss_kernel, n_rows=N, n_classes=C, block_rows=tb,
        block_cols=tc, num_col_blocks=num_col_blocks)

    # Raise the scoped-VMEM cap only when the chosen blocks need it
    # (double-buffered native-dtype input + f32 working set + small vectors).
    est = 2 * tb * tc * itemsize + 4 * tb * tc * 4 + 16 * tb * 4
    vmem_limit = int(min(48 * 2 ** 20, est * 5 // 4)) if est > 12 * 2 ** 20 else None

    per_row = pl.pallas_call(
        kernel,
        out_shape=jax.ShapeDtypeStruct((num_row_blocks * tb, 1), jnp.float32),
        grid=(num_row_blocks, num_col_blocks),
        in_specs=[
            pl.BlockSpec((tb, 1), lambda i, j: (i, 0)),     # targets
            pl.BlockSpec((tb, tc), lambda i, j: (i, j)),    # logits (native dtype)
        ],
        out_specs=pl.BlockSpec((tb, 1), lambda i, j: (i, 0)),
        scratch_shapes=[pltpu.VMEM((tb, 1), jnp.float32)] * 3,
        compiler_params=pltpu.CompilerParams(
            dimension_semantics=("parallel", "arbitrary"),
            vmem_limit_bytes=vmem_limit),
    )(t, logits)

    # Ragged / padded rows contribute exactly 0; divide by the true batch size.
    return jnp.sum(per_row) / jnp.float32(N)


def cross_entropy_loss_ref(logits, targets):
    """Independent pure-JAX reference (matches nn.CrossEntropyLoss defaults)."""
    x = logits.astype(jnp.float32)
    lse = jax.scipy.special.logsumexp(x, axis=1)
    tl = jnp.take_along_axis(x, targets.astype(jnp.int32)[:, None], axis=1)[:, 0]
    return jnp.mean(lse - tl)


if __name__ == "__main__":
    key = jax.random.PRNGKey(0)
    k1, k2, k3, k4 = jax.random.split(key, 4)

    # Test 1 (auto tiling): f32 logits, C=100 (not a multiple of 128, no padding
    # anywhere), N=200 -> two row blocks with a ragged, row-masked tail.
    N, C = 200, 100
    logits = jax.random.normal(k1, (N, C), dtype=jnp.float32)
    targets = jax.random.randint(k2, (N,), 0, C, dtype=jnp.int32)
    out = jax.block_until_ready(cross_entropy_loss(logits, targets))
    ref = jax.block_until_ready(cross_entropy_loss_ref(logits, targets))
    np.testing.assert_allclose(np.asarray(out), np.asarray(ref),
                               rtol=1e-5, atol=1e-5)

    # Test 2 (forced streaming path): bf16 logits DMA'd in native dtype, class
    # axis streamed in 128-wide chunks (ragged last chunk masked), 4 row blocks.
    N2, C2 = 64, 320
    logits2 = jax.random.normal(k3, (N2, C2)).astype(jnp.bfloat16)
    targets2 = jax.random.randint(k4, (N2,), 0, C2, dtype=jnp.int32)
    out2 = jax.block_until_ready(
        cross_entropy_loss(logits2, targets2, block_rows=16, block_cols=128))
    ref2 = jax.block_until_ready(cross_entropy_loss_ref(logits2, targets2))
    np.testing.assert_allclose(np.asarray(out2), np.asarray(ref2),
                               rtol=1e-4, atol=1e-4)

    print("KERNEL_OK")
</pallas_src>

<mosaic_0001>
module attributes {stable_mosaic.version = 11 : i64} {
  func.func @_ce_loss_kernel(%arg0: i32, %arg1: i32, %arg2: memref<104x1xi32, #tpu.memory_space<vmem>>, %arg3: memref<104x100xf32, #tpu.memory_space<vmem>>, %arg4: memref<104x1xf32, #tpu.memory_space<vmem>>, %arg5: memref<104x1xf32, #tpu.memory_space<vmem>>, %arg6: memref<104x1xf32, #tpu.memory_space<vmem>>, %arg7: memref<104x1xf32, #tpu.memory_space<vmem>>) attributes {dimension_semantics = [#tpu.dimension_semantics<parallel>, #tpu.dimension_semantics<arbitrary>], iteration_bounds = array<i64: 2, 1>, scalar_prefetch = 0 : i64, scratch_operands = 3 : i64, tpu.core_type = #tpu.core_type<tc>, window_params = [{transform_indices = @transform_0, window_bounds = array<i64: 104, 1>}, {transform_indices = @transform_1, window_bounds = array<i64: 104, 100>}, {transform_indices = @transform_2, window_bounds = array<i64: 104, 1>}]} {
    %c0_i32 = arith.constant 0 : i32
    %0 = arith.cmpi eq, %arg1, %c0_i32 : i32
    %1 = arith.extui %0 : i1 to i32
    %c0_i32_0 = arith.constant 0 : i32
    %2 = arith.cmpi ne, %1, %c0_i32_0 : i32
    scf.if %2 {
      %cst_21 = arith.constant 0xFF800000 : f32
      %37 = vector.broadcast %cst_21 : f32 to vector<104x1xf32>
      %c0_22 = arith.constant 0 : index
      %c0_23 = arith.constant 0 : index
      %38 = vector.load %arg5[%c0_22, %c0_23] : memref<104x1xf32, #tpu.memory_space<vmem>>, vector<104x1xf32>
      tpu.vector_store %arg5[%c0_22, %c0_23], %37 {strides = array<i32>} : memref<104x1xf32, #tpu.memory_space<vmem>>, vector<104x1xf32>,
      %cst_24 = arith.constant 0.000000e+00 : f32
      %39 = vector.broadcast %cst_24 : f32 to vector<104x1xf32>
      %c0_25 = arith.constant 0 : index
      %c0_26 = arith.constant 0 : index
      %40 = vector.load %arg6[%c0_25, %c0_26] : memref<104x1xf32, #tpu.memory_space<vmem>>, vector<104x1xf32>
      tpu.vector_store %arg6[%c0_25, %c0_26], %39 {strides = array<i32>} : memref<104x1xf32, #tpu.memory_space<vmem>>, vector<104x1xf32>,
      %cst_27 = arith.constant 0.000000e+00 : f32
      %41 = vector.broadcast %cst_27 : f32 to vector<104x1xf32>
      %c0_28 = arith.constant 0 : index
      %c0_29 = arith.constant 0 : index
      %42 = vector.load %arg7[%c0_28, %c0_29] : memref<104x1xf32, #tpu.memory_space<vmem>>, vector<104x1xf32>
      tpu.vector_store %arg7[%c0_28, %c0_29], %41 {strides = array<i32>} : memref<104x1xf32, #tpu.memory_space<vmem>>, vector<104x1xf32>,
    } else {
    }
    %c0 = arith.constant 0 : index
    %c0_1 = arith.constant 0 : index
    %3 = vector.load %arg3[%c0, %c0_1] : memref<104x100xf32, #tpu.memory_space<vmem>>, vector<104x100xf32>
    %c0_2 = arith.constant 0 : index
    %c0_3 = arith.constant 0 : index
    %4 = vector.load %arg2[%c0_2, %c0_3] : memref<104x1xi32, #tpu.memory_space<vmem>>, vector<104x1xi32>
    %c100_i32 = arith.constant 100 : i32
    %5 = arith.muli %arg1, %c100_i32 : i32
    %6 = tpu.iota {dimensions = array<i32: 1>} : vector<104x100xi32>
    %7 = vector.broadcast %5 : i32 to vector<104x100xi32>
    %8 = arith.addi %7, %6 : vector<104x100xi32>
    %c0_4 = arith.constant 0 : index
    %c0_5 = arith.constant 0 : index
    %9 = vector.load %arg7[%c0_4, %c0_5] : memref<104x1xf32, #tpu.memory_space<vmem>>, vector<104x1xf32>
    %10 = vector.broadcast %4 : vector<104x1xi32> to vector<104x100xi32>
    %11 = arith.cmpi eq, %8, %10 : vector<104x100xi32>
    %cst = arith.constant 0.000000e+00 : f32
    %12 = vector.broadcast %cst : f32 to vector<104x100xf32>
    %13 = arith.select %11, %3, %12 : vector<104x100xi1>, vector<104x100xf32>
    %cst_6 = arith.constant dense<0.000000e+00> : vector<104xf32>
    %14 = vector.multi_reduction <add>, %13, %cst_6 [1] : vector<104x100xf32> to vector<104xf32>
    %15 = vector.shape_cast %14 : vector<104xf32> to vector<104x1xf32>
    %16 = arith.addf %9, %15 : vector<104x1xf32>
    %c0_7 = arith.constant 0 : index
    %c0_8 = arith.constant 0 : index
    %17 = vector.load %arg5[%c0_7, %c0_8] : memref<104x1xf32, #tpu.memory_space<vmem>>, vector<104x1xf32>
    %cst_9 = arith.constant dense<0xFF800000> : vector<104xf32>
    %18 = vector.multi_reduction <maximumf>, %3, %cst_9 [1] : vector<104x100xf32> to vector<104xf32>
    %19 = vector.shape_cast %18 : vector<104xf32> to vector<104x1xf32>
    %20 = arith.maximumf %17, %19 : vector<104x1xf32>
    %21 = arith.subf %17, %20 : vector<104x1xf32>
    %22 = math.exp %21 : vector<104x1xf32>
    %c0_10 = arith.constant 0 : index
    %c0_11 = arith.constant 0 : index
    %23 = vector.load %arg6[%c0_10, %c0_11] : memref<104x1xf32, #tpu.memory_space<vmem>>, vector<104x1xf32>
    %24 = arith.mulf %22, %23 : vector<104x1xf32>
    %25 = vector.broadcast %20 : vector<104x1xf32> to vector<104x100xf32>
    %26 = arith.subf %3, %25 : vector<104x100xf32>
    %27 = math.exp %26 : vector<104x100xf32>
    %cst_12 = arith.constant dense<0.000000e+00> : vector<104xf32>
    %28 = vector.multi_reduction <add>, %27, %cst_12 [1] : vector<104x100xf32> to vector<104xf32>
    %29 = vector.shape_cast %28 : vector<104xf32> to vector<104x1xf32>
    %30 = arith.addf %24, %29 : vector<104x1xf32>
    %c0_13 = arith.constant 0 : index
    %c0_14 = arith.constant 0 : index
    %31 = vector.load %arg5[%c0_13, %c0_14] : memref<104x1xf32, #tpu.memory_space<vmem>>, vector<104x1xf32>
    tpu.vector_store %arg5[%c0_13, %c0_14], %20 {strides = array<i32>} : memref<104x1xf32, #tpu.memory_space<vmem>>, vector<104x1xf32>,
    %c0_15 = arith.constant 0 : index
    %c0_16 = arith.constant 0 : index
    %32 = vector.load %arg6[%c0_15, %c0_16] : memref<104x1xf32, #tpu.memory_space<vmem>>, vector<104x1xf32>
    tpu.vector_store %arg6[%c0_15, %c0_16], %30 {strides = array<i32>} : memref<104x1xf32, #tpu.memory_space<vmem>>, vector<104x1xf32>,
    %c0_17 = arith.constant 0 : index
    %c0_18 = arith.constant 0 : index
    %33 = vector.load %arg7[%c0_17, %c0_18] : memref<104x1xf32, #tpu.memory_space<vmem>>, vector<104x1xf32>
    tpu.vector_store %arg7[%c0_17, %c0_18], %16 {strides = array<i32>} : memref<104x1xf32, #tpu.memory_space<vmem>>, vector<104x1xf32>,
    %c0_i32_19 = arith.constant 0 : i32
    %34 = arith.cmpi eq, %arg1, %c0_i32_19 : i32
    %35 = arith.extui %34 : i1 to i32
    %c0_i32_20 = arith.constant 0 : i32
    %36 = arith.cmpi ne, %35, %c0_i32_20 : i32
    scf.if %36 {
      %37 = math.log %30 : vector<104x1xf32>
      %38 = arith.addf %20, %37 : vector<104x1xf32>
      %c104_i32 = arith.constant 104 : i32
      %39 = arith.muli %arg0, %c104_i32 : i32
      %40 = tpu.iota {dimensions = array<i32: 0>} : vector<104x1xi32>
      %41 = vector.broadcast %39 : i32 to vector<104x1xi32>
      %42 = arith.addi %41, %40 : vector<104x1xi32>
      %c200_i32 = arith.constant 200 : i32
      %43 = vector.broadcast %c200_i32 : i32 to vector<104x1xi32>
      %44 = arith.cmpi slt, %42, %43 : vector<104x1xi32>
      %45 = arith.subf %38, %16 : vector<104x1xf32>
      %cst_21 = arith.constant 0.000000e+00 : f32
      %46 = vector.broadcast %cst_21 : f32 to vector<104x1xf32>
      %47 = arith.select %44, %45, %46 : vector<104x1xi1>, vector<104x1xf32>
      %c0_22 = arith.constant 0 : index
      %c0_23 = arith.constant 0 : index
      %48 = vector.load %arg4[%c0_22, %c0_23] : memref<104x1xf32, #tpu.memory_space<vmem>>, vector<104x1xf32>
      tpu.vector_store %arg4[%c0_22, %c0_23], %47 {strides = array<i32>} : memref<104x1xf32, #tpu.memory_space<vmem>>, vector<104x1xf32>,
    } else {
    }
    return
  }
  func.func @transform_0(%arg0: i32, %arg1: i32) -> (i32, i32) {
    %c0_i32 = arith.constant 0 : i32
    %c0_i32_0 = arith.constant 0 : i32
    return %arg0, %c0_i32 : i32, i32
  }
  func.func @transform_1(%arg0: i32, %arg1: i32) -> (i32, i32) {
    %c0_i32 = arith.constant 0 : i32
    return %arg0, %arg1 : i32, i32
  }
  func.func @transform_2(%arg0: i32, %arg1: i32) -> (i32, i32) {
    %c0_i32 = arith.constant 0 : i32
    %c0_i32_0 = arith.constant 0 : i32
    return %arg0, %c0_i32 : i32, i32
  }
}

</mosaic_0001>

<llo_original>
// kernel: tpu_custom_call.1
$region0: #{tpu_custom_call.1}
  #allocation0 [shape = 'u32[]', space=smem, size = 0x4, offset = 0x4, fixed_abs, tag = 'smem constant byte address 0x4 - core index']
  #allocation1 [shape = 'u32[144,128]{1,0:T(1,128)}', space=vmem, size = 0x12000, scoped, tag = 'internal scratch']
  #allocation2 [shape = 'f32[104,1]{1,0:T(8,128)}', space=vmem, size = 0xd000, scoped, tag = 'scratch operand']
  #allocation3 [shape = 'f32[104,1]{1,0:T(8,128)}', space=vmem, size = 0xd000, scoped, tag = 'scratch operand']
  #allocation4 [shape = 'f32[104,1]{1,0:T(8,128)}', space=vmem, size = 0xd000, scoped, tag = 'scratch operand']
  %s0 = inlined_call_operand.vmem [shape: s32[200,1], index: 0, kind: input, shape index: {}]
  %s1 = inlined_call_operand.vmem [shape: f32[200,100], index: 1, kind: input, shape index: {}]
  %s2 = inlined_call_operand.vmem [shape: f32[208,1], index: 2, kind: output, shape index: {}]
  %s3 = sld [smem:[#allocation0]]
  $region49: #{tpu_custom_call.1} parent=0
    _
  %s5 = ssub.s32 1, %s3
  %s6 = scalar_select 0, %s5, %s3
  loop: start=0, step=1, limit=4
  $region2: #{tpu_custom_call.1} parent=0 // loop_pre_header
    _
  $region3: #{tpu_custom_call.1} parent=0 // loop_header
    %s8 = sphi 0, %s12
    %p9 = scmp.ge.s32.totalorder %s8, 4
    %s15 = sphi 0, %s27
    %s16 = sphi 0, %s23
    %s17 = sphi 0, %s15
    %s18 = sphi 0, %s16
    %s19 = sphi 0, %s17
    %s20 = sphi 0, %s18
    %s30 = sphi 0, %s32
    %s33 = sphi 0, %s30
    %s34 = sphi 0, %s33
    %s50 = sphi 0, %s34
    %s58 = sphi 0, %s60
    %s61 = sphi 0, %s58
    %s62 = sphi 0, %s61
    %s78 = sphi 0, %s62
    %s84 = sphi 0, %s86
    %s87 = sphi 0, %s84
    %s88 = sphi 0, %s87
    %s104 = sphi 0, %s88
  $region4: #{tpu_custom_call.1} parent=0 // loop_header_branch
    %11 = sbr.rel (%p9) target = $region8
  $region5: #{tpu_custom_call.1} parent=0 // loop_body
    %s13 = ssub.s32 %s8, 1
    %s14 = ssub.s32 %s8, 2
    %s21 = sadd.s32 1, %s16
    %p22 = scmp.ge.s32.totalorder %s21, 1
    %s23 = scalar_select %p22, 0, %s21
    %s24 = sadd.s32 1, %s15
    %s25 = scalar_select %p22, %s24, %s15
    %p26 = scmp.ge.s32.totalorder %s25, 2
    %s27 = scalar_select %p26, 0, %s25
    %s28 = ssub.s32 %s15, %s27
    %p29 = scmp.eq.s32.totalorder %s28, 0
    %s31 = sadd.s32 %s30, 1
    %s32 = scalar_select %p29, %s30, %s31
    %p35 = pneg %p29
    %p36 = scmp.eq.s32.totalorder %s8, 1
    %p37 = por %p35, %p36
    %p38 = scmp.ne.s32.totalorder %s30, %s33
    %p39 = scmp.eq.s32.totalorder %s8, 0
    %p40 = por %p38, %p39
    %p41 = scmp.ne.s32.totalorder %s30, %s33
    %p42 = scmp.eq.s32.totalorder %s13, 1
    %p43 = por %p41, %p42
    %p44 = scmp.ne.s32.totalorder %s33, %s34
    %p45 = scmp.eq.s32.totalorder %s13, 0
    %p46 = por %p44, %p45
    %p47 = scmp.ne.s32.totalorder %s33, %s34
    %p48 = scmp.eq.s32.totalorder %s14, 1
    %p49 = por %p47, %p48
    %p51 = scmp.ne.s32.totalorder %s34, %s50
    %p52 = scmp.eq.s32.totalorder %s14, 0
    %p53 = por %p51, %p52
    %s54 = ssub.s32 %s15, %s27
    %s55 = ssub.s32 %s16, %s23
    %s56 = sor.u32 %s54, %s55
    %p57 = scmp.eq.s32.totalorder %s56, 0
    %s59 = sadd.s32 %s58, 1
    %s60 = scalar_select %p57, %s58, %s59
    %p63 = pneg %p57
    %p64 = scmp.eq.s32.totalorder %s8, 1
    %p65 = por %p63, %p64
    %p66 = scmp.ne.s32.totalorder %s58, %s61
    %p67 = scmp.eq.s32.totalorder %s8, 0
    %p68 = por %p66, %p67
    %p69 = scmp.ne.s32.totalorder %s58, %s61
    %p70 = scmp.eq.s32.totalorder %s13, 1
    %p71 = por %p69, %p70
    %p72 = scmp.ne.s32.totalorder %s61, %s62
    %p73 = scmp.eq.s32.totalorder %s13, 0
    %p74 = por %p72, %p73
    %p75 = scmp.ne.s32.totalorder %s61, %s62
    %p76 = scmp.eq.s32.totalorder %s14, 1
    %p77 = por %p75, %p76
    %p79 = scmp.ne.s32.totalorder %s62, %s78
    %p80 = scmp.eq.s32.totalorder %s14, 0
    %p81 = por %p79, %p80
    %s82 = ssub.s32 %s15, %s27
    %p83 = scmp.eq.s32.totalorder %s82, 0
    %s85 = sadd.s32 %s84, 1
    %s86 = scalar_select %p83, %s84, %s85
    %p89 = pneg %p83
    %p90 = scmp.eq.s32.totalorder %s8, 1
    %p91 = por %p89, %p90
    %p92 = scmp.ne.s32.totalorder %s84, %s87
    %p93 = scmp.eq.s32.totalorder %s8, 0
    %p94 = por %p92, %p93
    %p95 = scmp.ne.s32.totalorder %s84, %s87
    %p96 = scmp.eq.s32.totalorder %s13, 1
    %p97 = por %p95, %p96
    %p98 = scmp.ne.s32.totalorder %s87, %s88
    %p99 = scmp.eq.s32.totalorder %s13, 0
    %p100 = por %p98, %p99
    %p101 = scmp.ne.s32.totalorder %s87, %s88
    %p102 = scmp.eq.s32.totalorder %s14, 1
    %p103 = por %p101, %p102
    %p105 = scmp.ne.s32.totalorder %s88, %s104
    %p106 = scmp.eq.s32.totalorder %s14, 0
    %p107 = por %p105, %p106
    %p108 = scmp.le.s32.totalorder 1, %s8
    %p109 = scmp.lt.s32.totalorder %s8, 3
    %p110 = pnand %p108, %p109
    %p111 = pneg %p110
    // Predicated region
    $region9: #{tpu_custom_call.1} parent=5 // pred_check
      _
    $region10: #{tpu_custom_call.1} parent=5 // pred_check_branch
      %113 = sbr.rel (%p110) target = $region12
    $region11: #{tpu_custom_call.1} parent=5 // pred_region
      %s114 = ssub.s32 %s8, 1
    $region12: #{tpu_custom_call.1} parent=5 // pred_fallthru
      _
    %p115 = scmp.lt.s32.totalorder %s8, 2
    // Predicated region
    $region13: #{tpu_custom_call.1} parent=5 // pred_check
      %p116 = pneg %p115
    $region14: #{tpu_custom_call.1} parent=5 // pred_check_branch
      %118 = sbr.rel (%p116) target = $region16
    $region15: #{tpu_custom_call.1} parent=5 // pred_region
      // Predicated region
      $region17: #{tpu_custom_call.1} parent=15 // pred_check
        %p119 = pneg %p40
      $region18: #{tpu_custom_call.1} parent=15 // pred_check_branch
        %121 = sbr.rel (%p119) target = $region20
      $region19: #{tpu_custom_call.1} parent=15 // pred_region
        %s122 = smul.u32 13, %s15
        %s123 = ssub.s32 25, %s122
        %p124 = scmp.lt.s32.totalorder %s123, 13
        %s125 = scalar_select %p124, %s123, 13
        %s126 = smul.u32 128, %s125
        %p127 = scmp.lt.s32.totalorder %s122, 24
        %s128 = scalar_select %p127, %s122, 24
        %s129 = smul.addr %s128, 8
        %s130 = scalar_lea.vmem %s0, %s129
        %s131 = smul.u32 13, %s15
        %s132 = ssub.s32 25, %s131
        %p133 = scmp.lt.s32.totalorder %s132, 13
        %s134 = scalar_select %p133, %s132, 13
        %s135 = smul.u32 128, %s134
      $region20: #{tpu_custom_call.1} parent=15 // pred_fallthru
        _
      // Predicated region
      $region21: #{tpu_custom_call.1} parent=15 // pred_check
        %p136 = pneg %p68
      $region22: #{tpu_custom_call.1} parent=15 // pred_check_branch
        %138 = sbr.rel (%p136) target = $region24
      $region23: #{tpu_custom_call.1} parent=15 // pred_region
        %s139 = smul.u32 13, %s15
        %s140 = ssub.s32 25, %s139
        %p141 = scmp.lt.s32.totalorder %s140, 13
        %s142 = scalar_select %p141, %s140, 13
        %s143 = smul.u32 128, %s142
        %p144 = scmp.lt.s32.totalorder %s139, 24
        %s145 = scalar_select %p144, %s139, 24
        %p146 = scmp.lt.s32.totalorder %s16, 0
        %s147 = scalar_select %p146, %s16, 0
        %s148 = sadd.s32 %s147, %s145
        %s149 = smul.addr %s148, 8
        %s150 = scalar_lea.vmem %s1, %s149
        %s151 = smul.u32 13, %s15
        %s152 = ssub.s32 25, %s151
        %p153 = scmp.lt.s32.totalorder %s152, 13
        %s154 = scalar_select %p153, %s152, 13
        %s155 = smul.u32 128, %s154
      $region24: #{tpu_custom_call.1} parent=15 // pred_fallthru
        _
    $region16: #{tpu_custom_call.1} parent=5 // pred_fallthru
      _
    %p156 = scmp.le.s32.totalorder 1, %s8
    %p157 = scmp.lt.s32.totalorder %s8, 3
    %p158 = pnand %p156, %p157
    %p159 = pneg %p158
    // Predicated region
    $region25: #{tpu_custom_call.1} parent=5 // pred_check
      _
    $region26: #{tpu_custom_call.1} parent=5 // pred_check_branch
      %161 = sbr.rel (%p158) target = $region28
    $region27: #{tpu_custom_call.1} parent=5 // pred_region
      %s162 = ssub.s32 %s8, 1
      %s163 = smul.u32 13, %s17
      %s164 = ssub.s32 25, %s163
      %p165 = scmp.lt.s32.totalorder %s164, 13
      %s166 = scalar_select %p165, %s164, 13
      %s167 = smul.u32 128, %s166
      %p168 = scmp.lt.s32.totalorder %s163, 24
      %s169 = scalar_select %p168, %s163, 24
      %s170 = smul.addr %s169, 8
      %s171 = scalar_lea.vmem %s0, %s170
      %p172 = pneg %p46
      %p173 = pneg %p43
      %s174 = smul.u32 13, %s17
      %s175 = ssub.s32 25, %s174
      %p176 = scmp.lt.s32.totalorder %s175, 13
      %s177 = scalar_select %p176, %s175, 13
      %s178 = smul.u32 128, %s177
      %p179 = scmp.lt.s32.totalorder %s174, 24
      %s180 = scalar_select %p179, %s174, 24
      %p181 = scmp.lt.s32.totalorder %s18, 0
      %s182 = scalar_select %p181, %s18, 0
      %s183 = sadd.s32 %s182, %s180
      %s184 = smul.addr %s183, 8
      %s185 = scalar_lea.vmem %s1, %s184
      %p186 = pneg %p74
      %p187 = pneg %p71
      %p188 = pneg %p100
      %p189 = pneg %p97
      %s190 = smul.u32 13, %s17
      %p191 = scmp.lt.s32.totalorder %s190, 25
      %s192 = scalar_select %p191, %s190, 25
      %s193 = smul.addr %s192, 8
      %s194 = scalar_lea.vmem %s2, %s193
      %s195 = smul.u32 13, %s17
      %s196 = ssub.s32 25, %s195
      %p197 = scmp.lt.s32.totalorder %s196, 13
      %s198 = scalar_select %p197, %s196, 13
      %s199 = smul.u32 128, %s198
      %p200 = scmp.lt.s32.totalorder %s195, 24
      %s201 = scalar_select %p200, %s195, 24
      %s202 = smul.addr %s201, 8
      %s203 = scalar_lea.vmem %s0, %s202
      %s204 = smul.u32 13, %s17
      %s205 = ssub.s32 25, %s204
      %p206 = scmp.lt.s32.totalorder %s205, 13
      %s207 = scalar_select %p206, %s205, 13
      %s208 = smul.u32 128, %s207
      %s209 = smul.u32 13, %s17
      %s210 = ssub.s32 25, %s209
      %p211 = scmp.lt.s32.totalorder %s210, 13
      %s212 = scalar_select %p211, %s210, 13
      %s213 = smul.u32 128, %s212
      %p214 = scmp.lt.s32.totalorder %s209, 24
      %s215 = scalar_select %p214, %s209, 24
      %p216 = scmp.lt.s32.totalorder %s18, 0
      %s217 = scalar_select %p216, %s18, 0
      %s218 = sadd.s32 %s217, %s215
      %s219 = smul.addr %s218, 8
      %s220 = scalar_lea.vmem %s1, %s219
      %s221 = smul.u32 13, %s17
      %s222 = ssub.s32 25, %s221
      %p223 = scmp.lt.s32.totalorder %s222, 13
      %s224 = scalar_select %p223, %s222, 13
      %s225 = smul.u32 128, %s224
      %s226 = smul.u32 13, %s17
      %p227 = scmp.lt.s32.totalorder %s226, 25
      %s228 = scalar_select %p227, %s226, 25
      %s229 = smul.addr %s228, 8
      %s230 = scalar_lea.vmem %s2, %s229
      %s231 = smul.u32 13, %s17
      %p232 = scmp.eq.s32.totalorder %s18, 0
      // Predicated region
      $region29: #{tpu_custom_call.1} parent=27 // pred_check
        %p233 = pneg %p232
      $region30: #{tpu_custom_call.1} parent=27 // pred_check_branch
        %235 = sbr.rel (%p233) target = $region32
      $region31: #{tpu_custom_call.1} parent=27 // pred_region
        %vm236 = vcmask 7168
        %237 = vst.msk [vmem:[#allocation2] sm:$0xff] %vm236, -inf
        %238 = vst.msk [vmem:[#allocation2 + $0x8] sm:$0xff] %vm236, -inf
        %239 = vst.msk [vmem:[#allocation2 + $0x10] sm:$0xff] %vm236, -inf
        %240 = vst.msk [vmem:[#allocation2 + $0x18] sm:$0xff] %vm236, -inf
        %241 = vst.msk [vmem:[#allocation2 + $0x20] sm:$0xff] %vm236, -inf
        %242 = vst.msk [vmem:[#allocation2 + $0x28] sm:$0xff] %vm236, -inf
        %243 = vst.msk [vmem:[#allocation2 + $0x30] sm:$0xff] %vm236, -inf
        %244 = vst.msk [vmem:[#allocation2 + $0x38] sm:$0xff] %vm236, -inf
        %245 = vst.msk [vmem:[#allocation2 + $0x40] sm:$0xff] %vm236, -inf
        %246 = vst.msk [vmem:[#allocation2 + $0x48] sm:$0xff] %vm236, -inf
        %247 = vst.msk [vmem:[#allocation2 + $0x50] sm:$0xff] %vm236, -inf
        %248 = vst.msk [vmem:[#allocation2 + $0x58] sm:$0xff] %vm236, -inf
        %249 = vst.msk [vmem:[#allocation2 + $0x60] sm:$0xff] %vm236, -inf
        %250 = vst.msk [vmem:[#allocation3] sm:$0xff] %vm236, 0.0
        %251 = vst.msk [vmem:[#allocation3 + $0x8] sm:$0xff] %vm236, 0.0
        %252 = vst.msk [vmem:[#allocation3 + $0x10] sm:$0xff] %vm236, 0.0
        %253 = vst.msk [vmem:[#allocation3 + $0x18] sm:$0xff] %vm236, 0.0
        %254 = vst.msk [vmem:[#allocation3 + $0x20] sm:$0xff] %vm236, 0.0
        %255 = vst.msk [vmem:[#allocation3 + $0x28] sm:$0xff] %vm236, 0.0
        %256 = vst.msk [vmem:[#allocation3 + $0x30] sm:$0xff] %vm236, 0.0
        %257 = vst.msk [vmem:[#allocation3 + $0x38] sm:$0xff] %vm236, 0.0
        %258 = vst.msk [vmem:[#allocation3 + $0x40] sm:$0xff] %vm236, 0.0
        %259 = vst.msk [vmem:[#allocation3 + $0x48] sm:$0xff] %vm236, 0.0
        %260 = vst.msk [vmem:[#allocation3 + $0x50] sm:$0xff] %vm236, 0.0
        %261 = vst.msk [vmem:[#allocation3 + $0x58] sm:$0xff] %vm236, 0.0
        %262 = vst.msk [vmem:[#allocation3 + $0x60] sm:$0xff] %vm236, 0.0
        %263 = vst.msk [vmem:[#allocation4] sm:$0xff] %vm236, 0.0
        %264 = vst.msk [vmem:[#allocation4 + $0x8] sm:$0xff] %vm236, 0.0
        %265 = vst.msk [vmem:[#allocation4 + $0x10] sm:$0xff] %vm236, 0.0
        %266 = vst.msk [vmem:[#allocation4 + $0x18] sm:$0xff] %vm236, 0.0
        %267 = vst.msk [vmem:[#allocation4 + $0x20] sm:$0xff] %vm236, 0.0
        %268 = vst.msk [vmem:[#allocation4 + $0x28] sm:$0xff] %vm236, 0.0
        %269 = vst.msk [vmem:[#allocation4 + $0x30] sm:$0xff] %vm236, 0.0
        %270 = vst.msk [vmem:[#allocation4 + $0x38] sm:$0xff] %vm236, 0.0
        %271 = vst.msk [vmem:[#allocation4 + $0x40] sm:$0xff] %vm236, 0.0
        %272 = vst.msk [vmem:[#allocation4 + $0x48] sm:$0xff] %vm236, 0.0
        %273 = vst.msk [vmem:[#allocation4 + $0x50] sm:$0xff] %vm236, 0.0
        %274 = vst.msk [vmem:[#allocation4 + $0x58] sm:$0xff] %vm236, 0.0
        %275 = vst.msk [vmem:[#allocation4 + $0x60] sm:$0xff] %vm236, 0.0
      $region32: #{tpu_custom_call.1} parent=27 // pred_fallthru
        _
      %v276 = vld [vmem:[%s220] sm:$0xff]
      %v277 = vld [vmem:[%s220 + $0x8] sm:$0xff]
      %v278 = vld [vmem:[%s220 + $0x10] sm:$0xff]
      %v279 = vld [vmem:[%s220 + $0x18] sm:$0xff]
      %v280 = vld [vmem:[%s220 + $0x20] sm:$0xff]
      %v281 = vld [vmem:[%s220 + $0x28] sm:$0xff]
      %v282 = vld [vmem:[%s220 + $0x30] sm:$0xff]
      %v283 = vld [vmem:[%s220 + $0x38] sm:$0xff]
      %v284 = vld [vmem:[%s220 + $0x40] sm:$0xff]
      %v285 = vld [vmem:[%s220 + $0x48] sm:$0xff]
      %v286 = vld [vmem:[%s220 + $0x50] sm:$0xff]
      %v287 = vld [vmem:[%s220 + $0x58] sm:$0xff]
      %v288 = vld [vmem:[%s220 + $0x60] sm:$0xff]
      %v289 = vld [vmem:[%s203] sm:$0xff]
      %v290 = vld [vmem:[%s203 + $0x8] sm:$0xff]
      %v291 = vld [vmem:[%s203 + $0x10] sm:$0xff]
      %v292 = vld [vmem:[%s203 + $0x18] sm:$0xff]
      %v293 = vld [vmem:[%s203 + $0x20] sm:$0xff]
      %v294 = vld [vmem:[%s203 + $0x28] sm:$0xff]
      %v295 = vld [vmem:[%s203 + $0x30] sm:$0xff]
      %v296 = vld [vmem:[%s203 + $0x38] sm:$0xff]
      %v297 = vld [vmem:[%s203 + $0x40] sm:$0xff]
      %v298 = vld [vmem:[%s203 + $0x48] sm:$0xff]
      %v299 = vld [vmem:[%s203 + $0x50] sm:$0xff]
      %v300 = vld [vmem:[%s203 + $0x58] sm:$0xff]
      %v301 = vld [vmem:[%s203 + $0x60] sm:$0xff]
      %s302 = smul.u32 %s18, 100
      %v303 = vlaneseq
      %v304 = vand.u32 %v303, 127
      %v305 = vstv %s302
      %v306 = vadd.s32 %v305, %v304
      %v307 = vld [vmem:[#allocation4] sm:$0xff]
      %v308 = vld [vmem:[#allocation4 + $0x8] sm:$0xff]
      %v309 = vld [vmem:[#allocation4 + $0x10] sm:$0xff]
      %v310 = vld [vmem:[#allocation4 + $0x18] sm:$0xff]
      %v311 = vld [vmem:[#allocation4 + $0x20] sm:$0xff]
      %v312 = vld [vmem:[#allocation4 + $0x28] sm:$0xff]
      %v313 = vld [vmem:[#allocation4 + $0x30] sm:$0xff]
      %v314 = vld [vmem:[#allocation4 + $0x38] sm:$0xff]
      %v315 = vld [vmem:[#allocation4 + $0x40] sm:$0xff]
      %v316 = vld [vmem:[#allocation4 + $0x48] sm:$0xff]
      %v317 = vld [vmem:[#allocation4 + $0x50] sm:$0xff]
      %v318 = vld [vmem:[#allocation4 + $0x58] sm:$0xff]
      %v319 = vld [vmem:[#allocation4 + $0x60] sm:$0xff]
      %320 = vset.pattern.permute.xlu0 0
      %321 = vperm.xlu0 %320, %v289
      %v322 = vpop.permute.xlu0 %321
      %323 = vset.pattern.permute.xlu0 0
      %324 = vperm.xlu0 %323, %v290
      %v325 = vpop.permute.xlu0 %324
      %326 = vset.pattern.permute.xlu0 0
      %327 = vperm.xlu0 %326, %v291
      %v328 = vpop.permute.xlu0 %327
      %329 = vset.pattern.permute.xlu0 0
      %330 = vperm.xlu0 %329, %v292
      %v331 = vpop.permute.xlu0 %330
      %332 = vset.pattern.permute.xlu0 0
      %333 = vperm.xlu0 %332, %v293
      %v334 = vpop.permute.xlu0 %333
      %335 = vset.pattern.permute.xlu0 0
      %336 = vperm.xlu0 %335, %v294
      %v337 = vpop.permute.xlu0 %336
      %338 = vset.pattern.permute.xlu0 0
      %339 = vperm.xlu0 %338, %v295
      %v340 = vpop.permute.xlu0 %339
      %341 = vset.pattern.permute.xlu0 0
      %342 = vperm.xlu0 %341, %v296
      %v343 = vpop.permute.xlu0 %342
      %344 = vset.pattern.permute.xlu0 0
      %345 = vperm.xlu0 %344, %v297
      %v346 = vpop.permute.xlu0 %345
      %347 = vset.pattern.permute.xlu0 0
      %348 = vperm.xlu0 %347, %v298
      %v349 = vpop.permute.xlu0 %348
      %350 = vset.pattern.permute.xlu0 0
      %351 = vperm.xlu0 %350, %v299
      %v352 = vpop.permute.xlu0 %351
      %353 = vset.pattern.permute.xlu0 0
      %354 = vperm.xlu0 %353, %v300
      %v355 = vpop.permute.xlu0 %354
      %356 = vset.pattern.permute.xlu0 0
      %357 = vperm.xlu0 %356, %v301
      %v358 = vpop.permute.xlu0 %357
      %vm359 = vcmp.eq.s32.totalorder %v306, %v322
      %vm360 = vcmp.eq.s32.totalorder %v306, %v325
      %vm361 = vcmp.eq.s32.totalorder %v306, %v328
      %vm362 = vcmp.eq.s32.totalorder %v306, %v331
      %vm363 = vcmp.eq.s32.totalorder %v306, %v334
      %vm364 = vcmp.eq.s32.totalorder %v306, %v337
      %vm365 = vcmp.eq.s32.totalorder %v306, %v340
      %vm366 = vcmp.eq.s32.totalorder %v306, %v343
      %vm367 = vcmp.eq.s32.totalorder %v306, %v346
      %vm368 = vcmp.eq.s32.totalorder %v306, %v349
      %vm369 = vcmp.eq.s32.totalorder %v306, %v352
      %vm370 = vcmp.eq.s32.totalorder %v306, %v355
      %vm371 = vcmp.eq.s32.totalorder %v306, %v358
      %v372 = vsel %vm359, %v276, 0.0
      %v373 = vsel %vm360, %v277, 0.0
      %v374 = vsel %vm361, %v278, 0.0
      %v375 = vsel %vm362, %v279, 0.0
      %v376 = vsel %vm363, %v280, 0.0
      %v377 = vsel %vm364, %v281, 0.0
      %v378 = vsel %vm365, %v282, 0.0
      %v379 = vsel %vm366, %v283, 0.0
      %v380 = vsel %vm367, %v284, 0.0
      %v381 = vsel %vm368, %v285, 0.0
      %v382 = vsel %vm369, %v286, 0.0
      %v383 = vsel %vm370, %v287, 0.0
      %v384 = vsel %vm371, %v288, 0.0
      %vm385 = vcmask 818176
      %v386 = vsel %vm385, %v372, 0.0
      %387 = vadd.xlane.f32.xlu0 %v386
      %v388 = vpop.xlane.xlu0 %387
      %v389 = vsel %vm385, %v373, 0.0
      %390 = vadd.xlane.f32.xlu0 %v389
      %v391 = vpop.xlane.xlu0 %390
      %v392 = vsel %vm385, %v374, 0.0
      %393 = vadd.xlane.f32.xlu0 %v392
      %v394 = vpop.xlane.xlu0 %393
      %v395 = vsel %vm385, %v375, 0.0
      %396 = vadd.xlane.f32.xlu0 %v395
      %v397 = vpop.xlane.xlu0 %396
      %v398 = vsel %vm385, %v376, 0.0
      %399 = vadd.xlane.f32.xlu0 %v398
      %v400 = vpop.xlane.xlu0 %399
      %v401 = vsel %vm385, %v377, 0.0
      %402 = vadd.xlane.f32.xlu0 %v401
      %v403 = vpop.xlane.xlu0 %402
      %v404 = vsel %vm385, %v378, 0.0
      %405 = vadd.xlane.f32.xlu0 %v404
      %v406 = vpop.xlane.xlu0 %405
      %v407 = vsel %vm385, %v379, 0.0
      %408 = vadd.xlane.f32.xlu0 %v407
      %v409 = vpop.xlane.xlu0 %408
      %v410 = vsel %vm385, %v380, 0.0
      %411 = vadd.xlane.f32.xlu0 %v410
      %v412 = vpop.xlane.xlu0 %411
      %v413 = vsel %vm385, %v381, 0.0
      %414 = vadd.xlane.f32.xlu0 %v413
      %v415 = vpop.xlane.xlu0 %414
      %v416 = vsel %vm385, %v382, 0.0
      %417 = vadd.xlane.f32.xlu0 %v416
      %v418 = vpop.xlane.xlu0 %417
      %v419 = vsel %vm385, %v383, 0.0
      %420 = vadd.xlane.f32.xlu0 %v419
      %v421 = vpop.xlane.xlu0 %420
      %v422 = vsel %vm385, %v384, 0.0
      %423 = vadd.xlane.f32.xlu0 %v422
      %v424 = vpop.xlane.xlu0 %423
      %v425 = vadd.f32 %v307, %v388
      %v426 = vadd.f32 %v308, %v391
      %v427 = vadd.f32 %v309, %v394
      %v428 = vadd.f32 %v310, %v397
      %v429 = vadd.f32 %v311, %v400
      %v430 = vadd.f32 %v312, %v403
      %v431 = vadd.f32 %v313, %v406
      %v432 = vadd.f32 %v314, %v409
      %v433 = vadd.f32 %v315, %v412
      %v434 = vadd.f32 %v316, %v415
      %v435 = vadd.f32 %v317, %v418
      %v436 = vadd.f32 %v318, %v421
      %v437 = vadd.f32 %v319, %v424
      %v438 = vld [vmem:[#allocation2] sm:$0xff]
      %v439 = vld [vmem:[#allocation2 + $0x8] sm:$0xff]
      %v440 = vld [vmem:[#allocation2 + $0x10] sm:$0xff]
      %v441 = vld [vmem:[#allocation2 + $0x18] sm:$0xff]
      %v442 = vld [vmem:[#allocation2 + $0x20] sm:$0xff]
      %v443 = vld [vmem:[#allocation2 + $0x28] sm:$0xff]
      %v444 = vld [vmem:[#allocation2 + $0x30] sm:$0xff]
      %v445 = vld [vmem:[#allocation2 + $0x38] sm:$0xff]
      %v446 = vld [vmem:[#allocation2 + $0x40] sm:$0xff]
      %v447 = vld [vmem:[#allocation2 + $0x48] sm:$0xff]
      %v448 = vld [vmem:[#allocation2 + $0x50] sm:$0xff]
      %v449 = vld [vmem:[#allocation2 + $0x58] sm:$0xff]
      %v450 = vld [vmem:[#allocation2 + $0x60] sm:$0xff]
      %v451 = vsel %vm385, %v276, -inf
      %452 = vmax.xlane.f32.xlu0 %v451
      %v453 = vpop.xlane.xlu0 %452
      %v454 = vsel %vm385, %v277, -inf
      %455 = vmax.xlane.f32.xlu0 %v454
      %v456 = vpop.xlane.xlu0 %455
      %v457 = vsel %vm385, %v278, -inf
      %458 = vmax.xlane.f32.xlu0 %v457
      %v459 = vpop.xlane.xlu0 %458
      %v460 = vsel %vm385, %v279, -inf
      %461 = vmax.xlane.f32.xlu0 %v460
      %v462 = vpop.xlane.xlu0 %461
      %v463 = vsel %vm385, %v280, -inf
      %464 = vmax.xlane.f32.xlu0 %v463
      %v465 = vpop.xlane.xlu0 %464
      %v466 = vsel %vm385, %v281, -inf
      %467 = vmax.xlane.f32.xlu0 %v466
      %v468 = vpop.xlane.xlu0 %467
      %v469 = vsel %vm385, %v282, -inf
      %470 = vmax.xlane.f32.xlu0 %v469
      %v471 = vpop.xlane.xlu0 %470
      %v472 = vsel %vm385, %v283, -inf
      %473 = vmax.xlane.f32.xlu0 %v472
      %v474 = vpop.xlane.xlu0 %473
      %v475 = vsel %vm385, %v284, -inf
      %476 = vmax.xlane.f32.xlu0 %v475
      %v477 = vpop.xlane.xlu0 %476
      %v478 = vsel %vm385, %v285, -inf
      %479 = vmax.xlane.f32.xlu0 %v478
      %v480 = vpop.xlane.xlu0 %479
      %v481 = vsel %vm385, %v286, -inf
      %482 = vmax.xlane.f32.xlu0 %v481
      %v483 = vpop.xlane.xlu0 %482
      %v484 = vsel %vm385, %v287, -inf
      %485 = vmax.xlane.f32.xlu0 %v484
      %v486 = vpop.xlane.xlu0 %485
      %v487 = vsel %vm385, %v288, -inf
      %488 = vmax.xlane.f32.xlu0 %v487
      %v489 = vpop.xlane.xlu0 %488
      %v490 = vmax.f32 %v438, %v453
      %v491 = vmax.f32 %v439, %v456
      %v492 = vmax.f32 %v440, %v459
      %v493 = vmax.f32 %v441, %v462
      %v494 = vmax.f32 %v442, %v465
      %v495 = vmax.f32 %v443, %v468
      %v496 = vmax.f32 %v444, %v471
      %v497 = vmax.f32 %v445, %v474
      %v498 = vmax.f32 %v446, %v477
      %v499 = vmax.f32 %v447, %v480
      %v500 = vmax.f32 %v448, %v483
      %v501 = vmax.f32 %v449, %v486
      %v502 = vmax.f32 %v450, %v489
      %v503 = vsub.f32 %v438, %v490
      %v504 = vsub.f32 %v439, %v491
      %v505 = vsub.f32 %v440, %v492
      %v506 = vsub.f32 %v441, %v493
      %v507 = vsub.f32 %v442, %v494
      %v508 = vsub.f32 %v443, %v495
      %v509 = vsub.f32 %v444, %v496
      %v510 = vsub.f32 %v445, %v497
      %v511 = vsub.f32 %v446, %v498
      %v512 = vsub.f32 %v447, %v499
      %v513 = vsub.f32 %v448, %v500
      %v514 = vsub.f32 %v449, %v501
      %v515 = vsub.f32 %v450, %v502
      %v516 = vmul.f32 %v503, 1.442695
      %v517 = vpow.pop %v516
      %v518 = vmul.f32 %v504, 1.442695
      %v519 = vpow.pop %v518
      %v520 = vmul.f32 %v505, 1.442695
      %v521 = vpow.pop %v520
      %v522 = vmul.f32 %v506, 1.442695
      %v523 = vpow.pop %v522
      %v524 = vmul.f32 %v507, 1.442695
      %v525 = vpow.pop %v524
      %v526 = vmul.f32 %v508, 1.442695
      %v527 = vpow.pop %v526
      %v528 = vmul.f32 %v509, 1.442695
      %v529 = vpow.pop %v528
      %v530 = vmul.f32 %v510, 1.442695
      %v531 = vpow.pop %v530
      %v532 = vmul.f32 %v511, 1.442695
      %v533 = vpow.pop %v532
      %v534 = vmul.f32 %v512, 1.442695
      %v535 = vpow.pop %v534
      %v536 = vmul.f32 %v513, 1.442695
      %v537 = vpow.pop %v536
      %v538 = vmul.f32 %v514, 1.442695
      %v539 = vpow.pop %v538
      %v540 = vmul.f32 %v515, 1.442695
      %v541 = vpow.pop %v540
      %v542 = vld [vmem:[#allocation3] sm:$0xff]
      %v543 = vld [vmem:[#allocation3 + $0x8] sm:$0xff]
      %v544 = vld [vmem:[#allocation3 + $0x10] sm:$0xff]
      %v545 = vld [vmem:[#allocation3 + $0x18] sm:$0xff]
      %v546 = vld [vmem:[#allocation3 + $0x20] sm:$0xff]
      %v547 = vld [vmem:[#allocation3 + $0x28] sm:$0xff]
      %v548 = vld [vmem:[#allocation3 + $0x30] sm:$0xff]
      %v549 = vld [vmem:[#allocation3 + $0x38] sm:$0xff]
      %v550 = vld [vmem:[#allocation3 + $0x40] sm:$0xff]
      %v551 = vld [vmem:[#allocation3 + $0x48] sm:$0xff]
      %v552 = vld [vmem:[#allocation3 + $0x50] sm:$0xff]
      %v553 = vld [vmem:[#allocation3 + $0x58] sm:$0xff]
      %v554 = vld [vmem:[#allocation3 + $0x60] sm:$0xff]
      %v555 = vmul.f32 %v517, %v542
      %v556 = vmul.f32 %v519, %v543
      %v557 = vmul.f32 %v521, %v544
      %v558 = vmul.f32 %v523, %v545
      %v559 = vmul.f32 %v525, %v546
      %v560 = vmul.f32 %v527, %v547
      %v561 = vmul.f32 %v529, %v548
      %v562 = vmul.f32 %v531, %v549
      %v563 = vmul.f32 %v533, %v550
      %v564 = vmul.f32 %v535, %v551
      %v565 = vmul.f32 %v537, %v552
      %v566 = vmul.f32 %v539, %v553
      %v567 = vmul.f32 %v541, %v554
      %569 = vset.pattern.permute.xlu0 0
      %570 = vperm.xlu0 %569, %v490
      %v571 = vpop.permute.xlu0 %570
      %574 = vset.pattern.permute.xlu0 0
      %575 = vperm.xlu0 %574, %v491
      %v576 = vpop.permute.xlu0 %575
      %579 = vset.pattern.permute.xlu0 0
      %580 = vperm.xlu0 %579, %v492
      %v581 = vpop.permute.xlu0 %580
      %584 = vset.pattern.permute.xlu0 0
      %585 = vperm.xlu0 %584, %v493
      %v586 = vpop.permute.xlu0 %585
      %589 = vset.pattern.permute.xlu0 0
      %590 = vperm.xlu0 %589, %v494
      %v591 = vpop.permute.xlu0 %590
      %594 = vset.pattern.permute.xlu0 0
      %595 = vperm.xlu0 %594, %v495
      %v596 = vpop.permute.xlu0 %595
      %599 = vset.pattern.permute.xlu0 0
      %600 = vperm.xlu0 %599, %v496
      %v601 = vpop.permute.xlu0 %600
      %604 = vset.pattern.permute.xlu0 0
      %605 = vperm.xlu0 %604, %v497
      %v606 = vpop.permute.xlu0 %605
      %609 = vset.pattern.permute.xlu0 0
      %610 = vperm.xlu0 %609, %v498
      %v611 = vpop.permute.xlu0 %610
      %614 = vset.pattern.permute.xlu0 0
      %615 = vperm.xlu0 %614, %v499
      %v616 = vpop.permute.xlu0 %615
      %619 = vset.pattern.permute.xlu0 0
      %620 = vperm.xlu0 %619, %v500
      %v621 = vpop.permute.xlu0 %620
      %624 = vset.pattern.permute.xlu0 0
      %625 = vperm.xlu0 %624, %v501
      %v626 = vpop.permute.xlu0 %625
      %629 = vset.pattern.permute.xlu0 0
      %630 = vperm.xlu0 %629, %v502
      %v631 = vpop.permute.xlu0 %630
      %v633 = vsub.f32 %v276, %v571
      %v634 = vsub.f32 %v277, %v576
      %v635 = vsub.f32 %v278, %v581
      %v636 = vsub.f32 %v279, %v586
      %v637 = vsub.f32 %v280, %v591
      %v638 = vsub.f32 %v281, %v596
      %v639 = vsub.f32 %v282, %v601
      %v640 = vsub.f32 %v283, %v606
      %v641 = vsub.f32 %v284, %v611
      %v642 = vsub.f32 %v285, %v616
      %v643 = vsub.f32 %v286, %v621
      %v644 = vsub.f32 %v287, %v626
      %v645 = vsub.f32 %v288, %v631
      %v646 = vmul.f32 %v633, 1.442695
      %v647 = vpow.pop %v646
      %v648 = vmul.f32 %v634, 1.442695
      %v649 = vpow.pop %v648
      %v650 = vmul.f32 %v635, 1.442695
      %v651 = vpow.pop %v650
      %v652 = vmul.f32 %v636, 1.442695
      %v653 = vpow.pop %v652
      %v654 = vmul.f32 %v637, 1.442695
      %v655 = vpow.pop %v654
      %v656 = vmul.f32 %v638, 1.442695
      %v657 = vpow.pop %v656
      %v658 = vmul.f32 %v639, 1.442695
      %v659 = vpow.pop %v658
      %v660 = vmul.f32 %v640, 1.442695
      %v661 = vpow.pop %v660
      %v662 = vmul.f32 %v641, 1.442695
      %v663 = vpow.pop %v662
      %v664 = vmul.f32 %v642, 1.442695
      %v665 = vpow.pop %v664
      %v666 = vmul.f32 %v643, 1.442695
      %v667 = vpow.pop %v666
      %v668 = vmul.f32 %v644, 1.442695
      %v669 = vpow.pop %v668
      %v670 = vmul.f32 %v645, 1.442695
      %v671 = vpow.pop %v670
      %v672 = vsel %vm385, %v647, 0.0
      %673 = vadd.xlane.f32.xlu0 %v672
      %v674 = vpop.xlane.xlu0 %673
      %v675 = vsel %vm385, %v649, 0.0
      %676 = vadd.xlane.f32.xlu0 %v675
      %v677 = vpop.xlane.xlu0 %676
      %v678 = vsel %vm385, %v651, 0.0
      %679 = vadd.xlane.f32.xlu0 %v678
      %v680 = vpop.xlane.xlu0 %679
      %v681 = vsel %vm385, %v653, 0.0
      %682 = vadd.xlane.f32.xlu0 %v681
      %v683 = vpop.xlane.xlu0 %682
      %v684 = vsel %vm385, %v655, 0.0
      %685 = vadd.xlane.f32.xlu0 %v684
      %v686 = vpop.xlane.xlu0 %685
      %v687 = vsel %vm385, %v657, 0.0
      %688 = vadd.xlane.f32.xlu0 %v687
      %v689 = vpop.xlane.xlu0 %688
      %v690 = vsel %vm385, %v659, 0.0
      %691 = vadd.xlane.f32.xlu0 %v690
      %v692 = vpop.xlane.xlu0 %691
      %v693 = vsel %vm385, %v661, 0.0
      %694 = vadd.xlane.f32.xlu0 %v693
      %v695 = vpop.xlane.xlu0 %694
      %v696 = vsel %vm385, %v663, 0.0
      %697 = vadd.xlane.f32.xlu0 %v696
      %v698 = vpop.xlane.xlu0 %697
      %v699 = vsel %vm385, %v665, 0.0
      %700 = vadd.xlane.f32.xlu0 %v699
      %v701 = vpop.xlane.xlu0 %700
      %v702 = vsel %vm385, %v667, 0.0
      %703 = vadd.xlane.f32.xlu0 %v702
      %v704 = vpop.xlane.xlu0 %703
      %v705 = vsel %vm385, %v669, 0.0
      %706 = vadd.xlane.f32.xlu0 %v705
      %v707 = vpop.xlane.xlu0 %706
      %v708 = vsel %vm385, %v671, 0.0
      %709 = vadd.xlane.f32.xlu0 %v708
      %v710 = vpop.xlane.xlu0 %709
      %v711 = vadd.f32 %v555, %v674
      %v712 = vadd.f32 %v556, %v677
      %v713 = vadd.f32 %v557, %v680
      %v714 = vadd.f32 %v558, %v683
      %v715 = vadd.f32 %v559, %v686
      %v716 = vadd.f32 %v560, %v689
      %v717 = vadd.f32 %v561, %v692
      %v718 = vadd.f32 %v562, %v695
      %v719 = vadd.f32 %v563, %v698
      %v720 = vadd.f32 %v564, %v701
      %v721 = vadd.f32 %v565, %v704
      %v722 = vadd.f32 %v566, %v707
      %v723 = vadd.f32 %v567, %v710
      %vm724 = vcmask 7168
      %725 = vst.msk [vmem:[#allocation2] sm:$0xff] %vm724, %v490
      %726 = vst.msk [vmem:[#allocation2 + $0x8] sm:$0xff] %vm724, %v491
      %727 = vst.msk [vmem:[#allocation2 + $0x10] sm:$0xff] %vm724, %v492
      %728 = vst.msk [vmem:[#allocation2 + $0x18] sm:$0xff] %vm724, %v493
      %729 = vst.msk [vmem:[#allocation2 + $0x20] sm:$0xff] %vm724, %v494
      %730 = vst.msk [vmem:[#allocation2 + $0x28] sm:$0xff] %vm724, %v495
      %731 = vst.msk [vmem:[#allocation2 + $0x30] sm:$0xff] %vm724, %v496
      %732 = vst.msk [vmem:[#allocation2 + $0x38] sm:$0xff] %vm724, %v497
      %733 = vst.msk [vmem:[#allocation2 + $0x40] sm:$0xff] %vm724, %v498
      %734 = vst.msk [vmem:[#allocation2 + $0x48] sm:$0xff] %vm724, %v499
      %735 = vst.msk [vmem:[#allocation2 + $0x50] sm:$0xff] %vm724, %v500
      %736 = vst.msk [vmem:[#allocation2 + $0x58] sm:$0xff] %vm724, %v501
      %737 = vst.msk [vmem:[#allocation2 + $0x60] sm:$0xff] %vm724, %v502
      %738 = vst.msk [vmem:[#allocation3] sm:$0xff] %vm724, %v711
      %739 = vst.msk [vmem:[#allocation3 + $0x8] sm:$0xff] %vm724, %v712
      %740 = vst.msk [vmem:[#allocation3 + $0x10] sm:$0xff] %vm724, %v713
      %741 = vst.msk [vmem:[#allocation3 + $0x18] sm:$0xff] %vm724, %v714
      %742 = vst.msk [vmem:[#allocation3 + $0x20] sm:$0xff] %vm724, %v715
      %743 = vst.msk [vmem:[#allocation3 + $0x28] sm:$0xff] %vm724, %v716
      %744 = vst.msk [vmem:[#allocation3 + $0x30] sm:$0xff] %vm724, %v717
      %745 = vst.msk [vmem:[#allocation3 + $0x38] sm:$0xff] %vm724, %v718
      %746 = vst.msk [vmem:[#allocation3 + $0x40] sm:$0xff] %vm724, %v719
      %747 = vst.msk [vmem:[#allocation3 + $0x48] sm:$0xff] %vm724, %v720
      %748 = vst.msk [vmem:[#allocation3 + $0x50] sm:$0xff] %vm724, %v721
      %749 = vst.msk [vmem:[#allocation3 + $0x58] sm:$0xff] %vm724, %v722
      %750 = vst.msk [vmem:[#allocation3 + $0x60] sm:$0xff] %vm724, %v723
      %751 = vst.msk [vmem:[#allocation4] sm:$0xff] %vm724, %v425
      %752 = vst.msk [vmem:[#allocation4 + $0x8] sm:$0xff] %vm724, %v426
      %753 = vst.msk [vmem:[#allocation4 + $0x10] sm:$0xff] %vm724, %v427
      %754 = vst.msk [vmem:[#allocation4 + $0x18] sm:$0xff] %vm724, %v428
      %755 = vst.msk [vmem:[#allocation4 + $0x20] sm:$0xff] %vm724, %v429
      %756 = vst.msk [vmem:[#allocation4 + $0x28] sm:$0xff] %vm724, %v430
      %757 = vst.msk [vmem:[#allocation4 + $0x30] sm:$0xff] %vm724, %v431
      %758 = vst.msk [vmem:[#allocation4 + $0x38] sm:$0xff] %vm724, %v432
      %759 = vst.msk [vmem:[#allocation4 + $0x40] sm:$0xff] %vm724, %v433
      %760 = vst.msk [vmem:[#allocation4 + $0x48] sm:$0xff] %vm724, %v434
      %761 = vst.msk [vmem:[#allocation4 + $0x50] sm:$0xff] %vm724, %v435
      %762 = vst.msk [vmem:[#allocation4 + $0x58] sm:$0xff] %vm724, %v436
      %763 = vst.msk [vmem:[#allocation4 + $0x60] sm:$0xff] %vm724, %v437
      // Predicated region
      $region33: #{tpu_custom_call.1} parent=27 // pred_check
        %p764 = pneg %p232
      $region34: #{tpu_custom_call.1} parent=27 // pred_check_branch
        %766 = sbr.rel (%p764) target = $region36
      $region35: #{tpu_custom_call.1} parent=27 // pred_region
        %v767 = vlog2.pop %v711
        %v768 = vmul.f32 %v767, 0.6931472
        %v769 = vlog2.pop %v712
        %v770 = vmul.f32 %v769, 0.6931472
        %v771 = vlog2.pop %v713
        %v772 = vmul.f32 %v771, 0.6931472
        %v773 = vlog2.pop %v714
        %v774 = vmul.f32 %v773, 0.6931472
        %v775 = vlog2.pop %v715
        %v776 = vmul.f32 %v775, 0.6931472
        %v777 = vlog2.pop %v716
        %v778 = vmul.f32 %v777, 0.6931472
        %v779 = vlog2.pop %v717
        %v780 = vmul.f32 %v779, 0.6931472
        %v781 = vlog2.pop %v718
        %v782 = vmul.f32 %v781, 0.6931472
        %v783 = vlog2.pop %v719
        %v784 = vmul.f32 %v783, 0.6931472
        %v785 = vlog2.pop %v720
        %v786 = vmul.f32 %v785, 0.6931472
        %v787 = vlog2.pop %v721
        %v788 = vmul.f32 %v787, 0.6931472
        %v789 = vlog2.pop %v722
        %v790 = vmul.f32 %v789, 0.6931472
        %v791 = vlog2.pop %v723
        %v792 = vmul.f32 %v791, 0.6931472
        %v793 = vadd.f32 %v490, %v768
        %v794 = vadd.f32 %v491, %v770
        %v795 = vadd.f32 %v492, %v772
        %v796 = vadd.f32 %v493, %v774
        %v797 = vadd.f32 %v494, %v776
        %v798 = vadd.f32 %v495, %v778
        %v799 = vadd.f32 %v496, %v780
        %v800 = vadd.f32 %v497, %v782
        %v801 = vadd.f32 %v498, %v784
        %v802 = vadd.f32 %v499, %v786
        %v803 = vadd.f32 %v500, %v788
        %v804 = vadd.f32 %v501, %v790
        %v805 = vadd.f32 %v502, %v792
        %s806 = smul.u32 %s17, 104
        %v807 = vlaneseq
        %v808 = vshrl.u32 %v807, 7
        %v809 = vadd.s32 %v808, 8
        %v810 = vadd.s32 %v808, 16
        %v811 = vadd.s32 %v808, 24
        %v812 = vadd.s32 %v808, 32
        %v813 = vadd.s32 %v808, 40
        %v814 = vadd.s32 %v808, 48
        %v815 = vadd.s32 %v808, 56
        %v816 = vadd.s32 %v808, 64
        %v817 = vadd.s32 %v808, 72
        %v818 = vadd.s32 %v808, 80
        %v819 = vadd.s32 %v808, 88
        %v820 = vadd.s32 %v808, 96
        %v821 = vstv %s806
        %v822 = vadd.s32 %v821, %v808
        %v823 = vadd.s32 %v821, %v809
        %v824 = vadd.s32 %v821, %v810
        %v825 = vadd.s32 %v821, %v811
        %v826 = vadd.s32 %v821, %v812
        %v827 = vadd.s32 %v821, %v813
        %v828 = vadd.s32 %v821, %v814
        %v829 = vadd.s32 %v821, %v815
        %v830 = vadd.s32 %v821, %v816
        %v831 = vadd.s32 %v821, %v817
        %v832 = vadd.s32 %v821, %v818
        %v833 = vadd.s32 %v821, %v819
        %v834 = vadd.s32 %v821, %v820
        %vm835 = vcmp.lt.s32.totalorder %v822, 200
        %vm836 = vcmp.lt.s32.totalorder %v823, 200
        %vm837 = vcmp.lt.s32.totalorder %v824, 200
        %vm838 = vcmp.lt.s32.totalorder %v825, 200
        %vm839 = vcmp.lt.s32.totalorder %v826, 200
        %vm840 = vcmp.lt.s32.totalorder %v827, 200
        %vm841 = vcmp.lt.s32.totalorder %v828, 200
        %vm842 = vcmp.lt.s32.totalorder %v829, 200
        %vm843 = vcmp.lt.s32.totalorder %v830, 200
        %vm844 = vcmp.lt.s32.totalorder %v831, 200
        %vm845 = vcmp.lt.s32.totalorder %v832, 200
        %vm846 = vcmp.lt.s32.totalorder %v833, 200
        %vm847 = vcmp.lt.s32.totalorder %v834, 200
        %v848 = vsub.f32 %v793, %v425
        %v849 = vsub.f32 %v794, %v426
        %v850 = vsub.f32 %v795, %v427
        %v851 = vsub.f32 %v796, %v428
        %v852 = vsub.f32 %v797, %v429
        %v853 = vsub.f32 %v798, %v430
        %v854 = vsub.f32 %v799, %v431
        %v855 = vsub.f32 %v800, %v432
        %v856 = vsub.f32 %v801, %v433
        %v857 = vsub.f32 %v802, %v434
        %v858 = vsub.f32 %v803, %v435
        %v859 = vsub.f32 %v804, %v436
        %v860 = vsub.f32 %v805, %v437
        %v861 = vsel %vm835, %v848, 0.0
        %v862 = vsel %vm836, %v849, 0.0
        %v863 = vsel %vm837, %v850, 0.0
        %v864 = vsel %vm838, %v851, 0.0
        %v865 = vsel %vm839, %v852, 0.0
        %v866 = vsel %vm840, %v853, 0.0
        %v867 = vsel %vm841, %v854, 0.0
        %v868 = vsel %vm842, %v855, 0.0
        %v869 = vsel %vm843, %v856, 0.0
        %v870 = vsel %vm844, %v857, 0.0
        %v871 = vsel %vm845, %v858, 0.0
        %v872 = vsel %vm846, %v859, 0.0
        %v873 = vsel %vm847, %v860, 0.0
        %874 = vst.msk [vmem:[%s230] sm:$0xff] %vm724, %v861
        %875 = vst.msk [vmem:[%s230 + $0x8] sm:$0xff] %vm724, %v862
        %876 = vst.msk [vmem:[%s230 + $0x10] sm:$0xff] %vm724, %v863
        %877 = vst.msk [vmem:[%s230 + $0x18] sm:$0xff] %vm724, %v864
        %878 = vst.msk [vmem:[%s230 + $0x20] sm:$0xff] %vm724, %v865
        %879 = vst.msk [vmem:[%s230 + $0x28] sm:$0xff] %vm724, %v866
        %880 = vst.msk [vmem:[%s230 + $0x30] sm:$0xff] %vm724, %v867
        %881 = vst.msk [vmem:[%s230 + $0x38] sm:$0xff] %vm724, %v868
        %882 = vst.msk [vmem:[%s230 + $0x40] sm:$0xff] %vm724, %v869
        %883 = vst.msk [vmem:[%s230 + $0x48] sm:$0xff] %vm724, %v870
        %884 = vst.msk [vmem:[%s230 + $0x50] sm:$0xff] %vm724, %v871
        %885 = vst.msk [vmem:[%s230 + $0x58] sm:$0xff] %vm724, %v872
        %886 = vst.msk [vmem:[%s230 + $0x60] sm:$0xff] %vm724, %v873
      $region36: #{tpu_custom_call.1} parent=27 // pred_fallthru
        _
      %s887 = smul.u32 13, %s17
      %p888 = scmp.lt.s32.totalorder %s887, 25
      %s889 = scalar_select %p888, %s887, 25
      %s890 = smul.addr %s889, 8
      %s891 = scalar_lea.vmem %s2, %s890
      // Predicated region
      $region37: #{tpu_custom_call.1} parent=27 // pred_check
        %p892 = pneg %p97
      $region38: #{tpu_custom_call.1} parent=27 // pred_check_branch
        %894 = sbr.rel (%p892) target = $region40
      $region39: #{tpu_custom_call.1} parent=27 // pred_region
        %s895 = smul.u32 13, %s17
      $region40: #{tpu_custom_call.1} parent=27 // pred_fallthru
        _
    $region28: #{tpu_custom_call.1} parent=5 // pred_fallthru
      _
    %p896 = scmp.le.s32.totalorder 2, %s8
    // Predicated region
    $region41: #{tpu_custom_call.1} parent=5 // pred_check
      %p897 = pneg %p896
    $region42: #{tpu_custom_call.1} parent=5 // pred_check_branch
      %899 = sbr.rel (%p897) target = $region44
    $region43: #{tpu_custom_call.1} parent=5 // pred_region
      %s900 = ssub.s32 %s8, 2
      // Predicated region
      $region45: #{tpu_custom_call.1} parent=43 // pred_check
        %p901 = pneg %p103
      $region46: #{tpu_custom_call.1} parent=43 // pred_check_branch
        %903 = sbr.rel (%p901) target = $region48
      $region47: #{tpu_custom_call.1} parent=43 // pred_region
        %s904 = smul.u32 13, %s19
        %p905 = scmp.lt.s32.totalorder %s904, 25
        %s906 = scalar_select %p905, %s904, 25
        %s907 = smul.addr %s906, 8
        %s908 = scalar_lea.vmem %s2, %s907
      $region48: #{tpu_custom_call.1} parent=43 // pred_fallthru
        _
    $region44: #{tpu_custom_call.1} parent=5 // pred_fallthru
      _
  $region6: #{tpu_custom_call.1} parent=0 // loop_footer
    %s12 = sadd.s32 1, %s8
  $region7: #{tpu_custom_call.1} parent=0 // loop_footer_branch
    %7 = sbr.rel target = $region3
  $region8: #{tpu_custom_call.1} parent=0 // loop_exit
    _

</llo_original>
